<compile_context>
chip_gen: v7x
topology: tpu7x:2x2x1
jax: 0.10.0
libtpu: 0.0.40
codegen_flags: <defaults>
</compile_context>

<pallas_src>
import functools

import jax
import jax.numpy as jnp
from jax.experimental import pallas as pl
from jax.experimental.pallas import tpu as pltpu

EPS = 1e-6


def _default_vmem_limit():
    """~3/4 of physical VMEM (96 MiB v5e/v6e, 48 MiB v7x); safe fallback otherwise."""
    try:
        cap = int(pltpu.get_tpu_info().vmem_capacity_bytes)
        if cap <= 0:
            raise ValueError("bad vmem capacity")
        return max(32 * 1024 * 1024, min(100 * 1024 * 1024, (cap * 3) // 4))
    except Exception:
        return 64 * 1024 * 1024


def _sublayer_connection_kernel(seed_ref,                       # scalar prefetch (SMEM)
                                x_row_ref, x_col_ref, gamma_ref, beta_ref,
                                w_ref, b_ref,                   # inputs
                                o_ref,                          # output
                                normed_ref,                     # VMEM scratch
                                *, dropout_p, training, tm, tn, size):
    i = pl.program_id(0)   # row-tile index
    j = pl.program_id(1)   # column-tile index (inner / fastest axis)

    # ---- LayerNorm once per row tile, cached in VMEM scratch (compute dtype) ----
    @pl.when(j == 0)
    def _():
        x = x_row_ref[...].astype(jnp.float32)                        # (tm, D)
        mean = jnp.mean(x, axis=-1, keepdims=True)
        centered = x - mean
        var_unb = jnp.sum(centered * centered, axis=-1, keepdims=True) / (size - 1)
        # per-row reciprocal (tm,1) instead of a full-tile (tm,D) divide
        inv = 1.0 / (jnp.sqrt(var_unb) + EPS)
        normed = centered * inv * gamma_ref[...] + beta_ref[...]
        normed_ref[...] = normed.astype(normed_ref.dtype)

    # ---- sublayer: dense projection on the MXU (low-precision in, f32 accumulate) ----
    y = jnp.dot(normed_ref[...], w_ref[...],
                preferred_element_type=jnp.float32) + b_ref[...]      # (tm, tn) f32

    # ---- dropout: counter-based hash PRNG + integer threshold (inverted dropout) ----
    if training and dropout_p > 0.0:
        rows = jax.lax.broadcasted_iota(jnp.uint32, (tm, tn), 0)
        cols = jax.lax.broadcasted_iota(jnp.uint32, (tm, tn), 1)
        g_rows = rows + (i * tm).astype(jnp.uint32)
        g_cols = cols + (j * tn).astype(jnp.uint32)
        z = g_rows * jnp.uint32(size) + g_cols                        # unique per element
        z = z ^ (seed_ref[0].astype(jnp.uint32) * jnp.uint32(0x9E3779B9))
        # lowbias32 avalanche finalizer
        z = z ^ (z >> jnp.uint32(16))
        z = z * jnp.uint32(0x7FEB352D)
        z = z ^ (z >> jnp.uint32(15))
        z = z * jnp.uint32(0x846CA68B)
        z = z ^ (z >> jnp.uint32(16))
        thresh = jnp.uint32(min(int(round(dropout_p * 4294967296.0)), 4294967295))
        keep = z >= thresh                                            # P(keep) = 1 - p
        y = jnp.where(keep, y * (1.0 / (1.0 - dropout_p)), 0.0)

    # ---- residual add: re-read x from the lane-dense column view (short live range) ----
    o_ref[...] = (x_col_ref[...].astype(jnp.float32) + y).astype(o_ref.dtype)


def sublayer_connection(x, gamma, beta, w, b, *, dropout_p=0.1, training=True,
                        seed=0, tm=512, tn=512, compute_dtype=jnp.bfloat16,
                        vmem_limit_bytes=None):
    """x: (batch, seq, size). Returns x + dropout(linear(layernorm(x)))."""
    batch, seq, size = x.shape
    assert size > 1, "LayerNorm with unbiased std needs size > 1"
    m = batch * seq

    tm = min(tm, m)
    tn = min(tn, size)
    assert m % tm == 0, "row tile must divide batch*seq"
    assert size % tn == 0, "column tile must divide size"
    assert tm % 8 == 0 or tm == m, "tm must be a multiple of 8 (f32 sublane tile)"
    assert tn % 128 == 0 or tn == size, "tn must be a multiple of 128 (lane tile)"

    x2 = x.reshape(m, size)
    gamma2 = gamma.reshape(1, size).astype(jnp.float32)
    beta2 = beta.reshape(1, size).astype(jnp.float32)
    w2 = w.astype(compute_dtype)          # bf16 weights: half VMEM/HBM, MXU-peak matmul
    b2 = b.reshape(1, size).astype(jnp.float32)
    seed_arr = jnp.array([seed], dtype=jnp.int32)

    if vmem_limit_bytes is None:
        vmem_limit_bytes = _default_vmem_limit()

    kernel = functools.partial(
        _sublayer_connection_kernel,
        dropout_p=float(dropout_p), training=bool(training),
        tm=tm, tn=tn, size=size)

    out = pl.pallas_call(
        kernel,
        out_shape=jax.ShapeDtypeStruct((m, size), x.dtype),
        grid_spec=pltpu.PrefetchScalarGridSpec(
            num_scalar_prefetch=1,
            grid=(m // tm, size // tn),      # j (output columns) iterates fastest
            in_specs=[
                pl.BlockSpec((tm, size), lambda i, j, s: (i, 0)),   # full row of x (LN stats)
                pl.BlockSpec((tm, tn),   lambda i, j, s: (i, j)),   # residual column tile of x
                pl.BlockSpec((1, size),  lambda i, j, s: (0, 0)),   # gamma
                pl.BlockSpec((1, size),  lambda i, j, s: (0, 0)),   # beta
                pl.BlockSpec((size, tn), lambda i, j, s: (0, j)),   # W column slab
                pl.BlockSpec((1, tn),    lambda i, j, s: (0, j)),   # bias column tile
            ],
            out_specs=pl.BlockSpec((tm, tn), lambda i, j, s: (i, j)),
            scratch_shapes=[pltpu.VMEM((tm, size), compute_dtype)],  # cached LayerNorm(x)
        ),
        compiler_params=pltpu.CompilerParams(
            dimension_semantics=("parallel", "arbitrary"),
            vmem_limit_bytes=int(vmem_limit_bytes)),
    )(seed_arr, x2, x2, gamma2, beta2, w2, b2)

    return out.reshape(batch, seq, size)


def _reference(x, gamma, beta, w, b):
    """Pure-JAX reference with dropout disabled (eval mode)."""
    xf = x.astype(jnp.float32)
    d = xf.shape[-1]
    mean = jnp.mean(xf, axis=-1, keepdims=True)
    centered = xf - mean
    std = jnp.sqrt(jnp.sum(centered * centered, axis=-1, keepdims=True) / (d - 1))
    normed = gamma * centered / (std + EPS) + beta
    y = jnp.einsum("bsd,de->bse", normed, w,
                   preferred_element_type=jnp.float32) + b
    return (xf + y).astype(x.dtype)


if __name__ == "__main__":
    key = jax.random.PRNGKey(0)
    batch, seq, size = 2, 8, 128     # small, but lane-dense hidden dim (multiple of 128)
    dropout_p = 0.1

    kx, kw, kb = jax.random.split(key, 3)
    x = jax.random.normal(kx, (batch, seq, size), dtype=jnp.float32)

    # LayerNorm params: ones/zeros; sublayer linear: random.
    gamma = jnp.ones((size,), dtype=jnp.float32)
    beta = jnp.zeros((size,), dtype=jnp.float32)
    w = jax.random.normal(kw, (size, size), dtype=jnp.float32) * (1.0 / jnp.sqrt(size))
    b = jax.random.normal(kb, (size,), dtype=jnp.float32) * 0.01

    # Correctness check with dropout disabled (eval mode), bf16 MXU path.
    out_eval = sublayer_connection(x, gamma, beta, w, b,
                                   dropout_p=dropout_p, training=False)
    out_eval = jax.block_until_ready(out_eval)
    ref = _reference(x, gamma, beta, w, b)
    assert jnp.allclose(out_eval, ref, atol=2e-2, rtol=2e-2), "mismatch vs reference"

    # Training-mode run with in-kernel hash dropout.
    out_train = sublayer_connection(x, gamma, beta, w, b,
                                    dropout_p=dropout_p, training=True, seed=1234)
    out_train = jax.block_until_ready(out_train)
    assert out_train.shape == (batch, seq, size)

    # Dropped elements pass the residual through exactly; fraction should be ~dropout_p.
    drop_frac = float(jnp.mean(jnp.equal(out_train, x).astype(jnp.float32)))
    assert 0.02 <= drop_frac <= 0.30, f"dropout fraction {drop_frac} far from {dropout_p}"

    print("KERNEL_OK")
</pallas_src>

<mosaic_0001>
module attributes {stable_mosaic.version = 11 : i64} {
  func.func @_sublayer_connection_kernel(%arg0: i32, %arg1: i32, %arg2: memref<1xi32, #tpu.memory_space<smem>>, %arg3: memref<16x128xf32, #tpu.memory_space<vmem>>, %arg4: memref<16x128xf32, #tpu.memory_space<vmem>>, %arg5: memref<1x128xf32, #tpu.memory_space<vmem>>, %arg6: memref<1x128xf32, #tpu.memory_space<vmem>>, %arg7: memref<128x128xbf16, #tpu.memory_space<vmem>>, %arg8: memref<1x128xf32, #tpu.memory_space<vmem>>, %arg9: memref<16x128xf32, #tpu.memory_space<vmem>>, %arg10: memref<16x128xbf16, #tpu.memory_space<vmem>>) attributes {dimension_semantics = [#tpu.dimension_semantics<parallel>, #tpu.dimension_semantics<arbitrary>], iteration_bounds = array<i64: 1, 1>, scalar_prefetch = 1 : i64, scratch_operands = 1 : i64, tpu.core_type = #tpu.core_type<tc>, window_params = [{transform_indices = @transform_0, window_bounds = array<i64: 16, 128>}, {transform_indices = @transform_1, window_bounds = array<i64: 16, 128>}, {pipeline_mode = #tpu.pipeline_mode<synchronous>, transform_indices = @transform_2, window_bounds = array<i64: 1, 128>}, {pipeline_mode = #tpu.pipeline_mode<synchronous>, transform_indices = @transform_3, window_bounds = array<i64: 1, 128>}, {transform_indices = @transform_4, window_bounds = array<i64: 128, 128>}, {transform_indices = @transform_5, window_bounds = array<i64: 1, 128>}, {transform_indices = @transform_6, window_bounds = array<i64: 16, 128>}]} {
    %c0_i32 = arith.constant 0 : i32
    %0 = arith.cmpi eq, %arg1, %c0_i32 : i32
    %1 = arith.extui %0 : i1 to i32
    %c0_i32_0 = arith.constant 0 : i32
    %2 = arith.cmpi ne, %1, %c0_i32_0 : i32
    scf.if %2 {
      %c0_10 = arith.constant 0 : index
      %c0_11 = arith.constant 0 : index
      %12 = vector.load %arg3[%c0_10, %c0_11] : memref<16x128xf32, #tpu.memory_space<vmem>>, vector<16x128xf32>
      %cst_12 = arith.constant dense<0.000000e+00> : vector<16xf32>
      %13 = vector.multi_reduction <add>, %12, %cst_12 [1] : vector<16x128xf32> to vector<16xf32>
      %14 = vector.shape_cast %13 : vector<16xf32> to vector<16x1xf32>
      %cst_13 = arith.constant 1.280000e+02 : f32
      %15 = vector.broadcast %cst_13 : f32 to vector<16x1xf32>
      %16 = arith.divf %14, %15 : vector<16x1xf32>
      %17 = vector.broadcast %16 : vector<16x1xf32> to vector<16x128xf32>
      %18 = arith.subf %12, %17 : vector<16x128xf32>
      %19 = arith.mulf %18, %18 : vector<16x128xf32>
      %cst_14 = arith.constant dense<0.000000e+00> : vector<16xf32>
      %20 = vector.multi_reduction <add>, %19, %cst_14 [1] : vector<16x128xf32> to vector<16xf32>
      %21 = vector.shape_cast %20 : vector<16xf32> to vector<16x1xf32>
      %cst_15 = arith.constant 1.270000e+02 : f32
      %22 = vector.broadcast %cst_15 : f32 to vector<16x1xf32>
      %23 = arith.divf %21, %22 : vector<16x1xf32>
      %24 = math.sqrt %23 : vector<16x1xf32>
      %cst_16 = arith.constant 9.99999997E-7 : f32
      %25 = vector.broadcast %cst_16 : f32 to vector<16x1xf32>
      %26 = arith.addf %24, %25 : vector<16x1xf32>
      %cst_17 = arith.constant 1.000000e+00 : f32
      %27 = vector.broadcast %cst_17 : f32 to vector<16x1xf32>
      %28 = arith.divf %27, %26 : vector<16x1xf32>
      %29 = vector.broadcast %28 : vector<16x1xf32> to vector<16x128xf32>
      %30 = arith.mulf %18, %29 : vector<16x128xf32>
      %c0_18 = arith.constant 0 : index
      %c0_19 = arith.constant 0 : index
      %31 = vector.load %arg5[%c0_18, %c0_19] : memref<1x128xf32, #tpu.memory_space<vmem>>, vector<1x128xf32>
      %32 = vector.broadcast %31 : vector<1x128xf32> to vector<16x128xf32>
      %33 = arith.mulf %30, %32 : vector<16x128xf32>
      %c0_20 = arith.constant 0 : index
      %c0_21 = arith.constant 0 : index
      %34 = vector.load %arg6[%c0_20, %c0_21] : memref<1x128xf32, #tpu.memory_space<vmem>>, vector<1x128xf32>
      %35 = vector.broadcast %34 : vector<1x128xf32> to vector<16x128xf32>
      %36 = arith.addf %33, %35 : vector<16x128xf32>
      %37 = arith.truncf %36 : vector<16x128xf32> to vector<16x128xbf16>
      %c0_22 = arith.constant 0 : index
      %c0_23 = arith.constant 0 : index
      %38 = vector.load %arg10[%c0_22, %c0_23] : memref<16x128xbf16, #tpu.memory_space<vmem>>, vector<16x128xbf16>
      tpu.vector_store %arg10[%c0_22, %c0_23], %37 {strides = array<i32>} : memref<16x128xbf16, #tpu.memory_space<vmem>>, vector<16x128xbf16>,
    } else {
    }
    %c0 = arith.constant 0 : index
    %c0_1 = arith.constant 0 : index
    %3 = vector.load %arg10[%c0, %c0_1] : memref<16x128xbf16, #tpu.memory_space<vmem>>, vector<16x128xbf16>
    %c0_2 = arith.constant 0 : index
    %c0_3 = arith.constant 0 : index
    %4 = vector.load %arg7[%c0_2, %c0_3] : memref<128x128xbf16, #tpu.memory_space<vmem>>, vector<128x128xbf16>
    %cst = arith.constant dense<0.000000e+00> : vector<16x128xf32>
    %5 = tpu.matmul %3, %4, %cst {dimension_numbers = #tpu.dot_dimension_numbers<[1], [0], [0], [1], [0, 0, 1, 1], [], []>} : vector<16x128xbf16>, vector<128x128xbf16>, vector<16x128xf32> -> vector<16x128xf32>
    %c0_4 = arith.constant 0 : index
    %c0_5 = arith.constant 0 : index
    %6 = vector.load %arg8[%c0_4, %c0_5] : memref<1x128xf32, #tpu.memory_space<vmem>>, vector<1x128xf32>
    %7 = vector.broadcast %6 : vector<1x128xf32> to vector<16x128xf32>
    %8 = arith.addf %5, %7 : vector<16x128xf32>
    %c0_6 = arith.constant 0 : index
    %c0_7 = arith.constant 0 : index
    %9 = vector.load %arg4[%c0_6, %c0_7] : memref<16x128xf32, #tpu.memory_space<vmem>>, vector<16x128xf32>
    %10 = arith.addf %9, %8 : vector<16x128xf32>
    %c0_8 = arith.constant 0 : index
    %c0_9 = arith.constant 0 : index
    %11 = vector.load %arg9[%c0_8, %c0_9] : memref<16x128xf32, #tpu.memory_space<vmem>>, vector<16x128xf32>
    tpu.vector_store %arg9[%c0_8, %c0_9], %10 {strides = array<i32>} : memref<16x128xf32, #tpu.memory_space<vmem>>, vector<16x128xf32>,
    return
  }
  func.func @transform_0(%arg0: i32, %arg1: i32, %arg2: memref<1xi32, #tpu.memory_space<smem>>) -> (i32, i32) {
    %c0_i32 = arith.constant 0 : i32
    %c0_i32_0 = arith.constant 0 : i32
    return %arg0, %c0_i32 : i32, i32
  }
  func.func @transform_1(%arg0: i32, %arg1: i32, %arg2: memref<1xi32, #tpu.memory_space<smem>>) -> (i32, i32) {
    %c0_i32 = arith.constant 0 : i32
    return %arg0, %arg1 : i32, i32
  }
  func.func @transform_2(%arg0: i32, %arg1: i32, %arg2: memref<1xi32, #tpu.memory_space<smem>>) -> (i32, i32) {
    %c0_i32 = arith.constant 0 : i32
    %c0_i32_0 = arith.constant 0 : i32
    %c0_i32_1 = arith.constant 0 : i32
    return %c0_i32, %c0_i32_0 : i32, i32
  }
  func.func @transform_3(%arg0: i32, %arg1: i32, %arg2: memref<1xi32, #tpu.memory_space<smem>>) -> (i32, i32) {
    %c0_i32 = arith.constant 0 : i32
    %c0_i32_0 = arith.constant 0 : i32
    %c0_i32_1 = arith.constant 0 : i32
    return %c0_i32, %c0_i32_0 : i32, i32
  }
  func.func @transform_4(%arg0: i32, %arg1: i32, %arg2: memref<1xi32, #tpu.memory_space<smem>>) -> (i32, i32) {
    %c0_i32 = arith.constant 0 : i32
    %c0_i32_0 = arith.constant 0 : i32
    return %c0_i32, %arg1 : i32, i32
  }
  func.func @transform_5(%arg0: i32, %arg1: i32, %arg2: memref<1xi32, #tpu.memory_space<smem>>) -> (i32, i32) {
    %c0_i32 = arith.constant 0 : i32
    %c0_i32_0 = arith.constant 0 : i32
    return %c0_i32, %arg1 : i32, i32
  }
  func.func @transform_6(%arg0: i32, %arg1: i32, %arg2: memref<1xi32, #tpu.memory_space<smem>>) -> (i32, i32) {
    %c0_i32 = arith.constant 0 : i32
    return %arg0, %arg1 : i32, i32
  }
}

</mosaic_0001>

<llo_original>
// kernel: tpu_custom_call.1
$region0: #{tpu_custom_call.1}
  #allocation0 [shape = 'u32[]', space=smem, size = 0x4, offset = 0x4, fixed_abs, tag = 'smem constant byte address 0x4 - core index']
  #allocation1 [shape = 'u32[144,128]{1,0:T(1,128)}', space=vmem, size = 0x12000, scoped, tag = 'internal scratch']
  #allocation2 [shape = 'bf16[16,128]{1,0:T(16,128)(2,1)}', space=vmem, size = 0x1000, scoped, tag = 'scratch operand']
  #allocation3 [shape = 's32[1]{0}', space=sflag, size = 0x4, scoped, tag = 'scoped memory for tpu_custom_call.1']
  #allocation4 [shape = 's32[1]{0:T(128)S(6)}', space=smem, size = 0x200, scoped, tag = 'prefetched SMEM operand 0']
  %s0 = inlined_call_operand.<no memory space> [shape: s32[1], index: 0, kind: input, shape index: {}]
  %s1 = inlined_call_operand.hbm [shape: f32[16,128], index: 1, kind: input, shape index: {}]
  %s2 = inlined_call_operand.hbm [shape: f32[16,128], index: 2, kind: input, shape index: {}]
  %s3 = inlined_call_operand.hbm [shape: f32[1,128], index: 3, kind: input, shape index: {}]
  %s4 = inlined_call_operand.hbm [shape: f32[1,128], index: 4, kind: input, shape index: {}]
  %s5 = inlined_call_operand.hbm [shape: bf16[128,128], index: 5, kind: input, shape index: {}]
  %s6 = inlined_call_operand.hbm [shape: f32[1,128], index: 6, kind: input, shape index: {}]
  %s7 = inlined_call_operand.hbm [shape: f32[16,128], index: 7, kind: output, shape index: {}]
  %s8 = sld [smem:[#allocation0]]
  $region62: #{tpu_custom_call.1} parent=0
    _
  %s10 = ssub.s32 1, %s8
  %s11 = scalar_select 0, %s10, %s8
  %12 = sst [smem:[#allocation4]] %s0
  $region1: #{tpu_custom_call.1} parent=0
    #allocation5 [shape = 'u8[8192]{0}', space=vmem, size = 0x2000, scoped, tag = 'input window, operand 1, single buffered']
    #allocation6 [shape = 's32[1]{0}', space=sflag, size = 0x4, scoped, tag = 'scoped memory for tpu_custom_call.1']
    #allocation7 [shape = 's32[1]{0}', space=sflag, size = 0x4, scoped, tag = 'scoped memory for tpu_custom_call.1']
    #allocation8 [shape = 'u8[8192]{0}', space=vmem, size = 0x2000, scoped, tag = 'input window, operand 2, single buffered']
    #allocation9 [shape = 's32[1]{0}', space=sflag, size = 0x4, scoped, tag = 'scoped memory for tpu_custom_call.1']
    #allocation10 [shape = 'u8[512]{0}', space=vmem, size = 0x400, scoped, tag = 'input window, operand 3, single buffered']
    #allocation11 [shape = 'u8[512]{0}', space=vmem, size = 0x400, scoped, tag = 'input window, operand 4, single buffered']
    #allocation12 [shape = 's32[1]{0}', space=sflag, size = 0x4, scoped, tag = 'scoped memory for tpu_custom_call.1']
    #allocation13 [shape = 'u8[32768]{0}', space=vmem, size = 0x8000, scoped, tag = 'input window, operand 5, single buffered']
    #allocation14 [shape = 'u8[512]{0}', space=vmem, size = 0x400, scoped, tag = 'input window, operand 6, single buffered']
    #allocation15 [shape = 's32[1]{0}', space=sflag, size = 0x4, scoped, tag = 'scoped memory for tpu_custom_call.1']
    #allocation16 [shape = 'u8[8192]{0}', space=vmem, size = 0x2000, scoped, tag = 'output window, operand 0, single buffered']
    %13 = vsyncpa [#allocation6], 0
    %14 = vsyncpa [#allocation9], 0
    %15 = vsyncpa [#allocation12], 0
    %16 = vsyncpa [#allocation15], 0
    %17 = vsyncpa [#allocation7], 0
    // Predicated region
    $region2: #{tpu_custom_call.1} parent=1 // pred_check
      _
    $region3: #{tpu_custom_call.1} parent=1 // pred_check_branch
      %19 = sbr.rel (0) target = $region5
    $region4: #{tpu_custom_call.1} parent=1 // pred_region
      %s21 = ssub.s32 256, 256
      %22 = vsyncadd [#allocation6], %s21
      %s23 = sshll.u32 [#allocation5], 4
      %s24 = int_to_ptr.vmem [resolvable:$true] %s23
      %29 = dma.hbm_to_vmem [thread:$0]  %s1, 256, %s24, [#allocation6], 128, 128, 8
    $region5: #{tpu_custom_call.1} parent=1 // pred_fallthru
      _
    // Predicated region
    $region6: #{tpu_custom_call.1} parent=1 // pred_check
      _
    $region7: #{tpu_custom_call.1} parent=1 // pred_check_branch
      %31 = sbr.rel (0) target = $region9
    $region8: #{tpu_custom_call.1} parent=1 // pred_region
      %s33 = ssub.s32 256, 256
      %34 = vsyncadd [#allocation9], %s33
      %s35 = sshll.u32 [#allocation8], 4
      %s36 = int_to_ptr.vmem [resolvable:$true] %s35
      %41 = dma.hbm_to_vmem [thread:$0]  %s2, 256, %s36, [#allocation9], 128, 128, 8
    $region9: #{tpu_custom_call.1} parent=1 // pred_fallthru
      _
    // Predicated region
    $region10: #{tpu_custom_call.1} parent=1 // pred_check
      _
    $region11: #{tpu_custom_call.1} parent=1 // pred_check_branch
      %43 = sbr.rel (0) target = $region13
    $region12: #{tpu_custom_call.1} parent=1 // pred_region
      %s45 = ssub.s32 16, 16
      %46 = vsyncadd [#allocation9], %s45
      %s48 = sshll.u32 [#allocation10], 4
      %s49 = int_to_ptr.vmem [resolvable:$true] %s48
      %51 = dma.hbm_to_vmem [thread:$0]  %s3, 16, %s49, [#allocation9]
    $region13: #{tpu_custom_call.1} parent=1 // pred_fallthru
      _
    // Predicated region
    $region14: #{tpu_custom_call.1} parent=1 // pred_check
      _
    $region15: #{tpu_custom_call.1} parent=1 // pred_check_branch
      %53 = sbr.rel (0) target = $region17
    $region16: #{tpu_custom_call.1} parent=1 // pred_region
      %s55 = ssub.s32 16, 16
      %56 = vsyncadd [#allocation12], %s55
      %s58 = sshll.u32 [#allocation11], 4
      %s59 = int_to_ptr.vmem [resolvable:$true] %s58
      %61 = dma.hbm_to_vmem [thread:$0]  %s4, 16, %s59, [#allocation12]
    $region17: #{tpu_custom_call.1} parent=1 // pred_fallthru
      _
    // Predicated region
    $region18: #{tpu_custom_call.1} parent=1 // pred_check
      _
    $region19: #{tpu_custom_call.1} parent=1 // pred_check_branch
      %63 = sbr.rel (0) target = $region21
    $region20: #{tpu_custom_call.1} parent=1 // pred_region
      %s65 = ssub.s32 1024, 1024
      %66 = vsyncadd [#allocation12], %s65
      %s67 = sshll.u32 [#allocation13], 4
      %s68 = int_to_ptr.vmem [resolvable:$true] %s67
      %73 = dma.hbm_to_vmem [thread:$0]  %s5, 1024, %s68, [#allocation12], 64, 64, 4
    $region21: #{tpu_custom_call.1} parent=1 // pred_fallthru
      _
    // Predicated region
    $region22: #{tpu_custom_call.1} parent=1 // pred_check
      _
    $region23: #{tpu_custom_call.1} parent=1 // pred_check_branch
      %75 = sbr.rel (0) target = $region25
    $region24: #{tpu_custom_call.1} parent=1 // pred_region
      %s77 = ssub.s32 16, 16
      %78 = vsyncadd [#allocation15], %s77
      %s80 = sshll.u32 [#allocation14], 4
      %s81 = int_to_ptr.vmem [resolvable:$true] %s80
      %83 = dma.hbm_to_vmem [thread:$0]  %s6, 16, %s81, [#allocation15]
    $region25: #{tpu_custom_call.1} parent=1 // pred_fallthru
      _
    // Predicated region
    $region26: #{tpu_custom_call.1} parent=1 // pred_check
      _
    $region27: #{tpu_custom_call.1} parent=1 // pred_check_branch
      %85 = sbr.rel (0) target = $region29
    $region28: #{tpu_custom_call.1} parent=1 // pred_region
      %86 = dma.done [#allocation6], 256
    $region29: #{tpu_custom_call.1} parent=1 // pred_fallthru
      _
    // Predicated region
    $region30: #{tpu_custom_call.1} parent=1 // pred_check
      _
    $region31: #{tpu_custom_call.1} parent=1 // pred_check_branch
      %88 = sbr.rel (0) target = $region33
    $region32: #{tpu_custom_call.1} parent=1 // pred_region
      %89 = dma.done [#allocation9], 256
    $region33: #{tpu_custom_call.1} parent=1 // pred_fallthru
      _
    // Predicated region
    $region34: #{tpu_custom_call.1} parent=1 // pred_check
      _
    $region35: #{tpu_custom_call.1} parent=1 // pred_check_branch
      %91 = sbr.rel (0) target = $region37
    $region36: #{tpu_custom_call.1} parent=1 // pred_region
      %92 = dma.done [#allocation9], 16
    $region37: #{tpu_custom_call.1} parent=1 // pred_fallthru
      _
    // Predicated region
    $region38: #{tpu_custom_call.1} parent=1 // pred_check
      _
    $region39: #{tpu_custom_call.1} parent=1 // pred_check_branch
      %94 = sbr.rel (0) target = $region41
    $region40: #{tpu_custom_call.1} parent=1 // pred_region
      %95 = dma.done [#allocation12], 16
    $region41: #{tpu_custom_call.1} parent=1 // pred_fallthru
      _
    // Predicated region
    $region42: #{tpu_custom_call.1} parent=1 // pred_check
      _
    $region43: #{tpu_custom_call.1} parent=1 // pred_check_branch
      %97 = sbr.rel (0) target = $region45
    $region44: #{tpu_custom_call.1} parent=1 // pred_region
      %98 = dma.done [#allocation12], 1024
    $region45: #{tpu_custom_call.1} parent=1 // pred_fallthru
      _
    // Predicated region
    $region46: #{tpu_custom_call.1} parent=1 // pred_check
      _
    $region47: #{tpu_custom_call.1} parent=1 // pred_check_branch
      %100 = sbr.rel (0) target = $region49
    $region48: #{tpu_custom_call.1} parent=1 // pred_region
      %101 = dma.done [#allocation15], 16
    $region49: #{tpu_custom_call.1} parent=1 // pred_fallthru
      _
    %p103 = scmp.eq.s32.totalorder 0, 0
    // Predicated region
    $region50: #{tpu_custom_call.1} parent=1 // pred_check
      %p104 = pneg %p103
    $region51: #{tpu_custom_call.1} parent=1 // pred_check_branch
      %106 = sbr.rel (%p104) target = $region53
    $region52: #{tpu_custom_call.1} parent=1 // pred_region
      %v107 = vld [vmem:[#allocation5] sm:$0xff]
      %v108 = vld [vmem:[#allocation5 + $0x8] sm:$0xff]
      %109 = vadd.xlane.f32.xlu0 %v107
      %v110 = vpop.xlane.xlu0 %109
      %111 = vadd.xlane.f32.xlu0 %v108
      %v112 = vpop.xlane.xlu0 %111
      %v113 = vrcp.pop 128.0
      %v114 = vmul.f32 %v110, %v113
      %v115 = vmul.f32 %v112, %v113
      %v116 = vsub.f32 %v107, %v114
      %v117 = vsub.f32 %v108, %v115
      %v118 = vmul.f32 %v116, %v116
      %v119 = vmul.f32 %v117, %v117
      %120 = vadd.xlane.f32.xlu0 %v118
      %v121 = vpop.xlane.xlu0 %120
      %122 = vadd.xlane.f32.xlu0 %v119
      %v123 = vpop.xlane.xlu0 %122
      %v124 = vrcp.pop 127.0
      %v125 = vmul.f32 %v121, %v124
      %v126 = vmul.f32 %v123, %v124
      %v127 = vrsqrt.pop %v125
      %v128 = vmul.f32 %v125, %v127
      %vm129 = vcmp.eq.f32.partialorder %v125, inf
      %v130 = vsel %vm129, %v125, %v128
      %vm131 = vcmp.eq.f32.partialorder %v125, 0.0
      %v132 = vand.u32 %v125, 2147483648
      %v133 = vsel %vm131, %v132, %v130
      %v134 = vrsqrt.pop %v126
      %v135 = vmul.f32 %v126, %v134
      %vm136 = vcmp.eq.f32.partialorder %v126, inf
      %v137 = vsel %vm136, %v126, %v135
      %vm138 = vcmp.eq.f32.partialorder %v126, 0.0
      %v139 = vand.u32 %v126, 2147483648
      %v140 = vsel %vm138, %v139, %v137
      %v141 = vadd.f32 %v133, 1e-06
      %v142 = vadd.f32 %v140, 1e-06
      %v143 = vrcp.pop %v141
      %v144 = vmul.f32 1.0, %v143
      %v145 = vrcp.pop %v142
      %v146 = vmul.f32 1.0, %v145
      %v147 = vmul.f32 %v116, %v144
      %v148 = vmul.f32 %v117, %v146
      %v149 = vld [vmem:[#allocation10] sm:$0x1]
      %v151 = vlaneseq
      %v152 = vshrl.u32 %v151, 7
      %v153 = vsub.s32 0, %v152
      %v154 = vrot.slane %v149, %v153
      %v156 = vmul.f32 %v147, %v154
      %v157 = vmul.f32 %v148, %v154
      %v158 = vld [vmem:[#allocation11] sm:$0x1]
      %v160 = vlaneseq
      %v161 = vshrl.u32 %v160, 7
      %v162 = vsub.s32 0, %v161
      %v163 = vrot.slane %v158, %v162
      %v165 = vadd.f32 %v156, %v163
      %v166 = vadd.f32 %v157, %v163
      %v167 = vpack.c.bf16 %v166, %v165
      %168 = vst [vmem:[#allocation2] sm:$0xff] %v167
    $region53: #{tpu_custom_call.1} parent=1 // pred_fallthru
      _
    %v169 = vld [vmem:[#allocation2] sm:$0xff]
    %v170 = vld [vmem:[#allocation13] sm:$0xf]
    %v171 = vld [vmem:[#allocation13 + $0x4] sm:$0xf]
    %v172 = vld [vmem:[#allocation13 + $0x8] sm:$0xf]
    %v173 = vld [vmem:[#allocation13 + $0xc] sm:$0xf]
    %v174 = vld [vmem:[#allocation13 + $0x10] sm:$0xf]
    %v175 = vld [vmem:[#allocation13 + $0x14] sm:$0xf]
    %v176 = vld [vmem:[#allocation13 + $0x18] sm:$0xf]
    %v177 = vld [vmem:[#allocation13 + $0x1c] sm:$0xf]
    %v178 = vld [vmem:[#allocation13 + $0x20] sm:$0xf]
    %v179 = vld [vmem:[#allocation13 + $0x24] sm:$0xf]
    %v180 = vld [vmem:[#allocation13 + $0x28] sm:$0xf]
    %v181 = vld [vmem:[#allocation13 + $0x2c] sm:$0xf]
    %v182 = vld [vmem:[#allocation13 + $0x30] sm:$0xf]
    %v183 = vld [vmem:[#allocation13 + $0x34] sm:$0xf]
    %v184 = vld [vmem:[#allocation13 + $0x38] sm:$0xf]
    %v185 = vld [vmem:[#allocation13 + $0x3c] sm:$0xf]
    %v186 = vld [vmem:[#allocation14] sm:$0x1]
    %v188 = vlaneseq
    %v189 = vshrl.u32 %v188, 7
    %v190 = vsub.s32 0, %v189
    %v191 = vrot.slane %v186, %v190
    %v209 = vunpack.c.l.b16 %v170
    %v210 = vunpack.c.l.b16 %v171
    %v211 = vunpack.c.l.b16 %v172
    %v212 = vunpack.c.l.b16 %v173
    %v213 = vunpack.c.l.b16 %v174
    %v214 = vunpack.c.l.b16 %v175
    %v215 = vunpack.c.l.b16 %v176
    %v216 = vunpack.c.l.b16 %v177
    %v217 = vunpack.c.l.b16 %v178
    %v218 = vunpack.c.l.b16 %v179
    %v219 = vunpack.c.l.b16 %v180
    %v220 = vunpack.c.l.b16 %v181
    %v221 = vunpack.c.l.b16 %v182
    %v222 = vunpack.c.l.b16 %v183
    %v223 = vunpack.c.l.b16 %v184
    %v224 = vunpack.c.l.b16 %v185
    %v225 = vpack.c.b16 %v210, %v209
    %v226 = vpack.c.b16 %v212, %v211
    %v227 = vpack.c.b16 %v214, %v213
    %v228 = vpack.c.b16 %v216, %v215
    %v229 = vpack.c.b16 %v218, %v217
    %v230 = vpack.c.b16 %v220, %v219
    %v231 = vpack.c.b16 %v222, %v221
    %v232 = vpack.c.b16 %v224, %v223
    %241 = vmatprep.subr.bf16.mxu0 0
    %242 = vmatpush1.bf16.msra.mxu0 %v225
    %243 = vmatprep.subr.bf16.mxu0 0
    %244 = vmatpush1.bf16.msra.mxu0 %v226
    %245 = vmatprep.subr.bf16.mxu0 0
    %246 = vmatpush1.bf16.msra.mxu0 %v227
    %247 = vmatprep.subr.bf16.mxu0 0
    %248 = vmatpush1.bf16.msra.mxu0 %v228
    %249 = vmatprep.subr.bf16.mxu0 0
    %250 = vmatpush1.bf16.msra.mxu0 %v229
    %251 = vmatprep.subr.bf16.mxu0 0
    %252 = vmatpush1.bf16.msra.mxu0 %v230
    %253 = vmatprep.subr.bf16.mxu0 0
    %254 = vmatpush1.bf16.msra.mxu0 %v231
    %255 = vmatprep.subr.bf16.mxu0 0
    %256 = vmatpush1.bf16.msra.mxu0 %v232
    %257 = vmatprep.subr.bf16.mxu0 0
    %258 = vmatpush1.bf16.msra.mxu0 0
    %259 = vmatprep.subr.bf16.mxu0 0
    %260 = vmatpush1.bf16.msra.mxu0 0
    %261 = vmatprep.subr.bf16.mxu0 0
    %262 = vmatpush1.bf16.msra.mxu0 0
    %263 = vmatprep.subr.bf16.mxu0 0
    %264 = vmatpush1.bf16.msra.mxu0 0
    %265 = vmatprep.subr.bf16.mxu0 0
    %266 = vmatpush1.bf16.msra.mxu0 0
    %267 = vmatprep.subr.bf16.mxu0 0
    %268 = vmatpush1.bf16.msra.mxu0 0
    %269 = vmatprep.subr.bf16.mxu0 0
    %270 = vmatpush1.bf16.msra.mxu0 0
    %271 = vmatprep.subr.bf16.mxu0 0
    %272 = vmatpush1.bf16.msra.mxu0 0
    %273 = vmatprep.mubr.bf16.mxu0 0
    %274 = vmatmul.mubr.bf16.gmra.mrb[0].mxu0 %v169
    %v275 = vpop.f32.mrb[0].mxu0
    %v276 = vadd.f32 %v191, %v275
    %v277 = vpop.f32.mrb[0].mxu0
    %v278 = vpop.f32.mrb[0].mxu0
    %v279 = vadd.f32 %v191, %v278
    %v280 = vpop.f32.mrb[0].mxu0
    %281 = vdwg.mxu0
    %v282 = vld [vmem:[#allocation8] sm:$0xff]
    %v283 = vld [vmem:[#allocation8 + $0x8] sm:$0xff]
    %v284 = vadd.f32 %v282, %v276
    %v285 = vadd.f32 %v283, %v279
    %286 = vst [vmem:[#allocation16] sm:$0xff] %v284
    %287 = vst [vmem:[#allocation16 + $0x8] sm:$0xff] %v285
    // Predicated region
    $region54: #{tpu_custom_call.1} parent=1 // pred_check
      _
    $region55: #{tpu_custom_call.1} parent=1 // pred_check_branch
      %289 = sbr.rel (0) target = $region57
    $region56: #{tpu_custom_call.1} parent=1 // pred_region
      %s291 = ssub.s32 256, 256
      %292 = vsyncadd [#allocation7], %s291
      %s293 = sshll.u32 [#allocation16], 4
      %s294 = int_to_ptr.vmem [resolvable:$true] %s293
      %299 = dma.vmem_to_hbm [thread:$0]  %s294, 256, %s7, [#allocation7], 128, 128, 8
    $region57: #{tpu_custom_call.1} parent=1 // pred_fallthru
      _
    // Predicated region
    $region58: #{tpu_custom_call.1} parent=1 // pred_check
      _
    $region59: #{tpu_custom_call.1} parent=1 // pred_check_branch
      %301 = sbr.rel (0) target = $region61
    $region60: #{tpu_custom_call.1} parent=1 // pred_region
      %302 = dma.done [#allocation7], 256
    $region61: #{tpu_custom_call.1} parent=1 // pred_fallthru
      _
    %303 = vsyncpa [#allocation6], 1
    %304 = vsyncpa [#allocation9], 1
    %305 = vsyncpa [#allocation12], 1
    %306 = vsyncpa [#allocation15], 1
    %307 = vsyncpa [#allocation7], 1

</llo_original>
